<compile_context>
chip_gen: v6e
topology: v6e:2x2x1
jax: 0.10.0
libtpu: 0.0.40
codegen_flags: <defaults>
</compile_context>

<pallas_src>
import jax
import jax.numpy as jnp
from jax.experimental import pallas as pl
from jax.experimental.pallas import tpu as pltpu


def _attn_kernel(full_ref,   # (Bb, T, D)  f32
                 last_ref,   # (Bb, 1, D)  f32
                 lens_ref,   # (Bb, 1, 1)  int32
                 w1t_ref,    # (D, D)      bf16   (W1^T)
                 w2t_ref,    # (D, D)      bf16   (W2^T)
                 b12_ref,    # (1, D)      f32    (b1 + b2)
                 v_ref,      # (1, D)      f32
                 out_ref):   # (Bb, 1, D)  f32
    Bb, T, D = full_ref.shape
    full = full_ref[...]                                            # f32, reused for ctx

    # --- W2 path (carries ~all FLOPs) on the MXU: bf16 inputs, f32 accumulate.
    # The f32 (Bb,T,D)->(Bb*T,D) reshape is tile-aligned (T % 8 == 0) -> no copy;
    # the bf16 cast is done here on the VPU so HBM only saw one f32 read.
    full_bf = full.reshape(Bb * T, D).astype(jnp.bfloat16)
    h2 = jnp.dot(full_bf, w2t_ref[...],
                 preferred_element_type=jnp.float32)                # (Bb*T, D) f32

    # --- W1 path (tiny), with b1+b2 folded in.
    h1 = jnp.dot(last_ref[...].reshape(Bb, D).astype(jnp.bfloat16), w1t_ref[...],
                 preferred_element_type=jnp.float32) + b12_ref[...]  # (Bb, D) f32

    h = jnp.tanh(h2.reshape(Bb, T, D) + h1.reshape(Bb, 1, D))       # (Bb, T, D) f32 (EUP)

    # --- score[b,t] = <V, h[b,t,:]> : VPU multiply + lane (XLU) reduce over D.
    # Stays in the (sublane=T, lane=D) layout -> no transpose; MXU stays free.
    # (V's scalar bias shifts every score equally -> cancels in the softmax.)
    score = jnp.sum(h * v_ref[...].reshape(1, 1, D),
                    axis=-1, keepdims=True)                          # (Bb, T, 1) f32

    # length mask: positions t >= lens[b] get -inf
    # (lens[b] == 0 -> all -inf -> NaN output, matching the PyTorch reference)
    pos = jax.lax.broadcasted_iota(jnp.int32, (Bb, T, 1), 1)
    score = jnp.where(pos < lens_ref[...], score, -jnp.inf)

    # softmax over T (sublane axis), all f32.
    m = jnp.max(score, axis=1, keepdims=True)                        # (Bb, 1, 1)
    e = jnp.exp(score - m)                                           # (Bb, T, 1)
    denom = jnp.sum(e, axis=1, keepdims=True)                        # (Bb, 1, 1)
    aw = e * pl.reciprocal(denom, approx=True)                       # (Bb, T, 1)

    # --- context = sum_t aw[b,t] * full[b,t,:] : VPU multiply + sublane (XLU) reduce.
    out_ref[...] = jnp.sum(full * aw, axis=1, keepdims=True)         # (Bb, 1, D) f32


def _pick_block_b(B, T, D, block_b=None):
    """Pick the batch block: largest divisor of B that (a) keeps the f32 `full`
    block around ~2 MiB (or <= a user-supplied block_b) and (b) leaves >= 2 grid
    steps when B >= 2 so v7x can shard the batch axis over its two TensorCores."""
    if block_b is None:
        block_b = max(1, (2 << 20) // (T * D * 4))
    cap = max(1, min(block_b, B // 2 if B >= 2 else 1))
    bb = 1
    for cand in range(1, cap + 1):
        if B % cand == 0:
            bb = cand
    return bb


def attn_forward(full, last, lens, w1, b1, w2, b2, v, bv, *, block_b=None):
    """full: (B, T, D) f32, last: (B, 1, D) or (B, D) f32, lens: (B,) int or None.
    w1, w2: (D, D) PyTorch Linear layout (out, in); v: (1, D); b1, b2, bv: biases.
    Returns the attention context vector, shape (B, D) f32."""
    B, T, D = full.shape
    del bv  # constant shift of every score -> no effect on the softmax output

    full_f32 = jnp.asarray(full, jnp.float32)
    last3 = jnp.asarray(last, jnp.float32).reshape(B, 1, D)
    if lens is None:
        lens3 = jnp.full((B, 1, 1), T, dtype=jnp.int32)
    else:
        lens3 = jnp.asarray(lens, jnp.int32).reshape(B, 1, 1)

    # Keep the in-kernel (Bb,T,D)<->(Bb*T,D) reshape tile-aligned (f32 sublane
    # tile = 8): pad T only if needed; padded rows are masked out via lens.
    # TODO(synk): pad T once upstream (in the LSTM output buffer) so this extra
    # HBM pass never runs inside the full Critic pipeline.
    Tp = ((T + 7) // 8) * 8
    if Tp != T:
        full_f32 = jnp.pad(full_f32, ((0, 0), (0, Tp - T), (0, 0)))
        lens3 = jnp.minimum(lens3, T)

    # Pre-transpose the (tiny) Linear weights to (in, out) so the kernel computes
    # x @ W^T, cast them to bf16 for the MXU, and fold the two hidden biases.
    w1t = jnp.asarray(w1, jnp.float32).T.astype(jnp.bfloat16)        # (D, D)
    w2t = jnp.asarray(w2, jnp.float32).T.astype(jnp.bfloat16)        # (D, D)
    b12 = (jnp.asarray(b1, jnp.float32) + jnp.asarray(b2, jnp.float32)).reshape(1, D)
    v_row = jnp.asarray(v, jnp.float32).reshape(1, D)

    Bb = _pick_block_b(B, Tp, D, block_b)
    grid = (B // Bb,)

    # Explicit VMEM budget: double-buffered f32 `full` block + live f32/bf16
    # intermediates (full_bf, h2, h) + small constants; clamp into [16, 64] MiB so
    # it is valid on v5e/v6e (128 MiB physical) and v7x (64 MiB physical).
    blk_full = Bb * Tp * D * 4
    vmem_est = 6 * blk_full + 4 * D * D * 2 + 8 * Bb * D * 4 + (2 << 20)
    vmem_limit = int(min(64 << 20, max(vmem_est, 16 << 20)))

    cost = pl.CostEstimate(
        flops=2 * B * Tp * D * D + 2 * B * D * D + 6 * B * Tp * D,
        transcendentals=B * Tp * D + B * Tp,
        bytes_accessed=(B * Tp * D + 2 * B * D) * 4 + 2 * D * D * 2)

    out = pl.pallas_call(
        _attn_kernel,
        out_shape=jax.ShapeDtypeStruct((B, 1, D), jnp.float32),
        grid=grid,
        in_specs=[
            pl.BlockSpec((Bb, Tp, D), lambda i: (i, 0, 0)),   # full  (f32, cast in-kernel)
            pl.BlockSpec((Bb, 1, D),  lambda i: (i, 0, 0)),   # last  (f32)
            pl.BlockSpec((Bb, 1, 1),  lambda i: (i, 0, 0)),   # lens  (int32)
            pl.BlockSpec((D, D),      lambda i: (0, 0)),      # W1^T  (bf16, constant)
            pl.BlockSpec((D, D),      lambda i: (0, 0)),      # W2^T  (bf16, constant)
            pl.BlockSpec((1, D),      lambda i: (0, 0)),      # b1+b2 (f32, constant)
            pl.BlockSpec((1, D),      lambda i: (0, 0)),      # V     (f32, constant)
        ],
        out_specs=pl.BlockSpec((Bb, 1, D), lambda i: (i, 0, 0)),
        compiler_params=pltpu.CompilerParams(
            dimension_semantics=("parallel",),   # batch axis -> v7x's two TCs
            vmem_limit_bytes=vmem_limit),
        cost_estimate=cost,
    )(full_f32, last3, lens3, w1t, w2t, b12, v_row)

    return out.reshape(B, D)


if __name__ == "__main__":
    # Small shapes consistent with the Critic defaults: hidden size D = 128
    # (intraday/interday_hiddenDim) keeps the lane dim dense; short seq, small batch.
    B, T, D = 4, 8, 128

    key = jax.random.PRNGKey(0)
    k_full, k_last, k_w1, k_b1, k_w2, k_b2, k_v, k_bv = jax.random.split(key, 8)

    full = jax.random.normal(k_full, (B, T, D), jnp.float32)
    last = jax.random.normal(k_last, (B, 1, D), jnp.float32)
    lens = jnp.array([T, 5, 1, 3], dtype=jnp.int32)     # masked past lens[b]

    # deterministic parameters (PyTorch Linear layout: (out_features, in_features))
    w1 = jax.random.normal(k_w1, (D, D), jnp.float32) * 0.1
    b1 = jax.random.normal(k_b1, (D,), jnp.float32) * 0.1
    w2 = jax.random.normal(k_w2, (D, D), jnp.float32) * 0.1
    b2 = jax.random.normal(k_b2, (D,), jnp.float32) * 0.1
    v = jax.random.normal(k_v, (1, D), jnp.float32) * 0.1
    bv = jax.random.normal(k_bv, (1,), jnp.float32) * 0.1

    ctx = attn_forward(full, last, lens, w1, b1, w2, b2, v, bv)
    jax.block_until_ready(ctx)

    # pure-JAX f32 reference of the same math; the kernel uses bf16 MXU inputs
    # (f32 accumulation), so compare with a bf16-appropriate tolerance.
    h = jnp.tanh((last @ w1.T + b1) + (full @ w2.T + b2))
    score = h @ v.T + bv                                   # (B, T, 1)
    mask = (jnp.arange(T)[None, :] < lens[:, None])[..., None]
    score = jnp.where(mask, score, -jnp.inf)
    aw = jax.nn.softmax(score, axis=1)
    ref = jnp.sum(aw * full, axis=1)

    assert ctx.shape == (B, D)
    assert jnp.allclose(ctx, ref, atol=2e-2, rtol=2e-2), "mismatch vs reference"

    print("KERNEL_OK")
</pallas_src>

<mosaic_0001>
module attributes {stable_mosaic.version = 11 : i64} {
  func.func @_attn_kernel(%arg0: i32, %arg1: memref<2x8x128xf32, #tpu.memory_space<vmem>>, %arg2: memref<2x1x128xf32, #tpu.memory_space<vmem>>, %arg3: memref<2x1x1xi32, #tpu.memory_space<vmem>>, %arg4: memref<128x128xbf16, #tpu.memory_space<vmem>>, %arg5: memref<128x128xbf16, #tpu.memory_space<vmem>>, %arg6: memref<1x128xf32, #tpu.memory_space<vmem>>, %arg7: memref<1x128xf32, #tpu.memory_space<vmem>>, %arg8: memref<2x1x128xf32, #tpu.memory_space<vmem>>) attributes {dimension_semantics = [#tpu.dimension_semantics<parallel>], iteration_bounds = array<i64: 2>, scalar_prefetch = 0 : i64, scratch_operands = 0 : i64, tpu.core_type = #tpu.core_type<tc>, window_params = [{transform_indices = @transform_0, window_bounds = array<i64: 2, 8, 128>}, {transform_indices = @transform_1, window_bounds = array<i64: 2, 1, 128>}, {transform_indices = @transform_2, window_bounds = array<i64: 2, 1, 1>}, {pipeline_mode = #tpu.pipeline_mode<synchronous>, transform_indices = @transform_3, window_bounds = array<i64: 128, 128>}, {pipeline_mode = #tpu.pipeline_mode<synchronous>, transform_indices = @transform_4, window_bounds = array<i64: 128, 128>}, {pipeline_mode = #tpu.pipeline_mode<synchronous>, transform_indices = @transform_5, window_bounds = array<i64: 1, 128>}, {pipeline_mode = #tpu.pipeline_mode<synchronous>, transform_indices = @transform_6, window_bounds = array<i64: 1, 128>}, {transform_indices = @transform_7, window_bounds = array<i64: 2, 1, 128>}]} {
    %c0 = arith.constant 0 : index
    %c0_0 = arith.constant 0 : index
    %c0_1 = arith.constant 0 : index
    %0 = vector.load %arg1[%c0, %c0_0, %c0_1] : memref<2x8x128xf32, #tpu.memory_space<vmem>>, vector<2x8x128xf32>
    %1 = vector.shape_cast %0 : vector<2x8x128xf32> to vector<16x128xf32>
    %2 = arith.truncf %1 : vector<16x128xf32> to vector<16x128xbf16>
    %c0_2 = arith.constant 0 : index
    %c0_3 = arith.constant 0 : index
    %3 = vector.load %arg5[%c0_2, %c0_3] : memref<128x128xbf16, #tpu.memory_space<vmem>>, vector<128x128xbf16>
    %cst = arith.constant dense<0.000000e+00> : vector<16x128xf32>
    %4 = tpu.matmul %2, %3, %cst {dimension_numbers = #tpu.dot_dimension_numbers<[1], [0], [0], [1], [0, 0, 1, 1], [], []>} : vector<16x128xbf16>, vector<128x128xbf16>, vector<16x128xf32> -> vector<16x128xf32>
    %c0_4 = arith.constant 0 : index
    %c0_5 = arith.constant 0 : index
    %c0_6 = arith.constant 0 : index
    %5 = vector.load %arg2[%c0_4, %c0_5, %c0_6] : memref<2x1x128xf32, #tpu.memory_space<vmem>>, vector<2x1x128xf32>
    %6 = vector.shape_cast %5 : vector<2x1x128xf32> to vector<2x128xf32>
    %7 = arith.truncf %6 : vector<2x128xf32> to vector<2x128xbf16>
    %c0_7 = arith.constant 0 : index
    %c0_8 = arith.constant 0 : index
    %8 = vector.load %arg4[%c0_7, %c0_8] : memref<128x128xbf16, #tpu.memory_space<vmem>>, vector<128x128xbf16>
    %cst_9 = arith.constant dense<0.000000e+00> : vector<2x128xf32>
    %9 = tpu.matmul %7, %8, %cst_9 {dimension_numbers = #tpu.dot_dimension_numbers<[1], [0], [0], [1], [0, 0, 1, 1], [], []>} : vector<2x128xbf16>, vector<128x128xbf16>, vector<2x128xf32> -> vector<2x128xf32>
    %c0_10 = arith.constant 0 : index
    %c0_11 = arith.constant 0 : index
    %10 = vector.load %arg6[%c0_10, %c0_11] : memref<1x128xf32, #tpu.memory_space<vmem>>, vector<1x128xf32>
    %11 = vector.broadcast %10 : vector<1x128xf32> to vector<2x128xf32>
    %12 = arith.addf %9, %11 : vector<2x128xf32>
    %13 = vector.shape_cast %4 : vector<16x128xf32> to vector<2x8x128xf32>
    %14 = vector.shape_cast %12 : vector<2x128xf32> to vector<2x1x128xf32>
    %15 = vector.broadcast %14 : vector<2x1x128xf32> to vector<2x8x128xf32>
    %16 = arith.addf %13, %15 : vector<2x8x128xf32>
    %17 = math.tanh %16 : vector<2x8x128xf32>
    %c0_12 = arith.constant 0 : index
    %c0_13 = arith.constant 0 : index
    %18 = vector.load %arg7[%c0_12, %c0_13] : memref<1x128xf32, #tpu.memory_space<vmem>>, vector<1x128xf32>
    %19 = vector.shape_cast %18 : vector<1x128xf32> to vector<1x1x128xf32>
    %20 = vector.broadcast %19 : vector<1x1x128xf32> to vector<2x8x128xf32>
    %21 = arith.mulf %17, %20 : vector<2x8x128xf32>
    %cst_14 = arith.constant dense<0.000000e+00> : vector<2x8xf32>
    %22 = vector.multi_reduction <add>, %21, %cst_14 [2] : vector<2x8x128xf32> to vector<2x8xf32>
    %23 = vector.shape_cast %22 : vector<2x8xf32> to vector<2x8x1xf32>
    %24 = tpu.iota {dimensions = array<i32: 1>} : vector<2x8x1xi32>
    %c0_15 = arith.constant 0 : index
    %c0_16 = arith.constant 0 : index
    %c0_17 = arith.constant 0 : index
    %25 = vector.load %arg3[%c0_15, %c0_16, %c0_17] : memref<2x1x1xi32, #tpu.memory_space<vmem>>, vector<2x1x1xi32>
    %26 = vector.broadcast %25 : vector<2x1x1xi32> to vector<2x8x1xi32>
    %27 = arith.cmpi slt, %24, %26 : vector<2x8x1xi32>
    %cst_18 = arith.constant 0xFF800000 : f32
    %28 = vector.broadcast %cst_18 : f32 to vector<2x8x1xf32>
    %29 = arith.select %27, %23, %28 : vector<2x8x1xi1>, vector<2x8x1xf32>
    %cst_19 = arith.constant dense<0xFF800000> : vector<2x1xf32>
    %30 = vector.multi_reduction <maximumf>, %29, %cst_19 [1] : vector<2x8x1xf32> to vector<2x1xf32>
    %31 = vector.shape_cast %30 : vector<2x1xf32> to vector<2x1x1xf32>
    %32 = vector.broadcast %31 : vector<2x1x1xf32> to vector<2x8x1xf32>
    %33 = arith.subf %29, %32 : vector<2x8x1xf32>
    %34 = math.exp %33 : vector<2x8x1xf32>
    %cst_20 = arith.constant dense<0.000000e+00> : vector<2x1xf32>
    %35 = vector.multi_reduction <add>, %34, %cst_20 [1] : vector<2x8x1xf32> to vector<2x1xf32>
    %36 = vector.shape_cast %35 : vector<2x1xf32> to vector<2x1x1xf32>
    %37 = tpu.reciprocal %36 {approx = true} : vector<2x1x1xf32> -> vector<2x1x1xf32>
    %38 = vector.broadcast %37 : vector<2x1x1xf32> to vector<2x8x1xf32>
    %39 = arith.mulf %34, %38 : vector<2x8x1xf32>
    %40 = vector.broadcast %39 : vector<2x8x1xf32> to vector<2x8x128xf32>
    %41 = arith.mulf %0, %40 : vector<2x8x128xf32>
    %cst_21 = arith.constant dense<0.000000e+00> : vector<2x128xf32>
    %42 = vector.multi_reduction <add>, %41, %cst_21 [1] : vector<2x8x128xf32> to vector<2x128xf32>
    %43 = vector.shape_cast %42 : vector<2x128xf32> to vector<2x1x128xf32>
    %c0_22 = arith.constant 0 : index
    %c0_23 = arith.constant 0 : index
    %c0_24 = arith.constant 0 : index
    %44 = vector.load %arg8[%c0_22, %c0_23, %c0_24] : memref<2x1x128xf32, #tpu.memory_space<vmem>>, vector<2x1x128xf32>
    tpu.vector_store %arg8[%c0_22, %c0_23, %c0_24], %43 {strides = array<i32>} : memref<2x1x128xf32, #tpu.memory_space<vmem>>, vector<2x1x128xf32>,
    return
  }
  func.func @transform_0(%arg0: i32) -> (i32, i32, i32) {
    %c0_i32 = arith.constant 0 : i32
    %c0_i32_0 = arith.constant 0 : i32
    %c0_i32_1 = arith.constant 0 : i32
    return %arg0, %c0_i32, %c0_i32_0 : i32, i32, i32
  }
  func.func @transform_1(%arg0: i32) -> (i32, i32, i32) {
    %c0_i32 = arith.constant 0 : i32
    %c0_i32_0 = arith.constant 0 : i32
    %c0_i32_1 = arith.constant 0 : i32
    return %arg0, %c0_i32, %c0_i32_0 : i32, i32, i32
  }
  func.func @transform_2(%arg0: i32) -> (i32, i32, i32) {
    %c0_i32 = arith.constant 0 : i32
    %c0_i32_0 = arith.constant 0 : i32
    %c0_i32_1 = arith.constant 0 : i32
    return %arg0, %c0_i32, %c0_i32_0 : i32, i32, i32
  }
  func.func @transform_3(%arg0: i32) -> (i32, i32) {
    %c0_i32 = arith.constant 0 : i32
    %c0_i32_0 = arith.constant 0 : i32
    %c0_i32_1 = arith.constant 0 : i32
    return %c0_i32, %c0_i32_0 : i32, i32
  }
  func.func @transform_4(%arg0: i32) -> (i32, i32) {
    %c0_i32 = arith.constant 0 : i32
    %c0_i32_0 = arith.constant 0 : i32
    %c0_i32_1 = arith.constant 0 : i32
    return %c0_i32, %c0_i32_0 : i32, i32
  }
  func.func @transform_5(%arg0: i32) -> (i32, i32) {
    %c0_i32 = arith.constant 0 : i32
    %c0_i32_0 = arith.constant 0 : i32
    %c0_i32_1 = arith.constant 0 : i32
    return %c0_i32, %c0_i32_0 : i32, i32
  }
  func.func @transform_6(%arg0: i32) -> (i32, i32) {
    %c0_i32 = arith.constant 0 : i32
    %c0_i32_0 = arith.constant 0 : i32
    %c0_i32_1 = arith.constant 0 : i32
    return %c0_i32, %c0_i32_0 : i32, i32
  }
  func.func @transform_7(%arg0: i32) -> (i32, i32, i32) {
    %c0_i32 = arith.constant 0 : i32
    %c0_i32_0 = arith.constant 0 : i32
    %c0_i32_1 = arith.constant 0 : i32
    return %arg0, %c0_i32, %c0_i32_0 : i32, i32, i32
  }
}

</mosaic_0001>

<llo_original>
// kernel: tpu_custom_call.1
$region0: #{tpu_custom_call.1}
  #allocation0 [shape = 'u32[]', space=smem, size = 0x4, offset = 0x4, fixed_abs, tag = 'smem constant byte address 0x4 - core index']
  #allocation1 [shape = 'u32[144,128]{1,0:T(1,128)}', space=vmem, size = 0x12000, scoped, tag = 'internal scratch']
  %s0 = inlined_call_operand.hbm [shape: f32[4,8,128], index: 0, kind: input, shape index: {}]
  %s1 = inlined_call_operand.vmem [shape: f32[4,1,128], index: 1, kind: input, shape index: {}]
  %s2 = inlined_call_operand.vmem [shape: s32[4,1,1], index: 2, kind: input, shape index: {}]
  %s3 = inlined_call_operand.hbm [shape: bf16[128,128], index: 3, kind: input, shape index: {}]
  %s4 = inlined_call_operand.hbm [shape: bf16[128,128], index: 4, kind: input, shape index: {}]
  %s5 = inlined_call_operand.vmem [shape: f32[1,128], index: 5, kind: input, shape index: {}]
  %s6 = inlined_call_operand.vmem [shape: f32[1,128], index: 6, kind: input, shape index: {}]
  %s7 = inlined_call_operand.hbm [shape: f32[4,1,128], index: 7, kind: output, shape index: {}]
  %s8 = sld [smem:[#allocation0]]
  $region73: #{tpu_custom_call.1} parent=0
    _
  %s10 = ssub.s32 1, %s8
  %s11 = scalar_select 0, %s10, %s8
  $region1: #{tpu_custom_call.1} parent=0
    #allocation2 [shape = 'u8[16384]{0}', space=vmem, size = 0x4000, scoped, tag = 'input window, operand 0']
    #allocation3 [shape = 's32[2]{0}', space=sflag, size = 0x8, scoped, tag = 'scoped memory for tpu_custom_call.1']
    #allocation4 [shape = 's32[2]{0}', space=sflag, size = 0x8, scoped, tag = 'scoped memory for tpu_custom_call.1']
    #allocation5 [shape = 'u8[32768]{0}', space=vmem, size = 0x8000, scoped, tag = 'input window, operand 3, single buffered']
    #allocation6 [shape = 's32[1]{0}', space=sflag, size = 0x4, scoped, tag = 'scoped memory for tpu_custom_call.1']
    #allocation7 [shape = 'u8[32768]{0}', space=vmem, size = 0x8000, scoped, tag = 'input window, operand 4, single buffered']
    #allocation8 [shape = 'u8[2048]{0}', space=vmem, size = 0x800, scoped, tag = 'output window, operand 0']
    %12 = vsyncpa [#allocation3], 0
    %s13 = scalar_lea.sflag [#allocation3], 1
    %14 = vsyncpa %s13, 0
    %15 = vsyncpa [#allocation6], 0
    %16 = vsyncpa [#allocation4], 0
    %s17 = scalar_lea.sflag [#allocation4], 1
    %18 = vsyncpa %s17, 0
    loop: start=0, step=1, limit=4
    $region2: #{tpu_custom_call.1} parent=1 // loop_pre_header
      _
    $region3: #{tpu_custom_call.1} parent=1 // loop_header
      %s20 = sphi 0, %s24
      %p21 = scmp.ge.s32.totalorder %s20, 4
      %s30 = sphi 0, %s32
      %s33 = sphi 0, %s30
      %s34 = sphi 0, %s33
      %s50 = sphi 0, %s34
      %s56 = sphi 0, %s58
      %s59 = sphi 0, %s56
      %s60 = sphi 0, %s59
      %s76 = sphi 0, %s60
      %s82 = sphi 0, %s84
      %s85 = sphi 0, %s82
      %s86 = sphi 0, %s85
      %s102 = sphi 0, %s86
      %s106 = sphi 0, %s106
      %s108 = sphi 0, %s106
      %s109 = sphi 0, %s108
      %s123 = sphi 0, %s109
      %s127 = sphi 0, %s127
      %s129 = sphi 0, %s127
      %s130 = sphi 0, %s129
      %s144 = sphi 0, %s130
      %s148 = sphi 0, %s148
      %s150 = sphi 0, %s148
      %s151 = sphi 0, %s150
      %s165 = sphi 0, %s151
      %s169 = sphi 0, %s169
      %s171 = sphi 0, %s169
      %s172 = sphi 0, %s171
      %s186 = sphi 0, %s172
      %s192 = sphi 0, %s194
      %s195 = sphi 0, %s192
      %s196 = sphi 0, %s195
      %s212 = sphi 0, %s196
    $region4: #{tpu_custom_call.1} parent=1 // loop_header_branch
      %23 = sbr.rel (%p21) target = $region8
    $region5: #{tpu_custom_call.1} parent=1 // loop_body
      %s25 = ssub.s32 %s20, 1
      %s26 = ssub.s32 %s20, 2
      %s27 = sadd.s32 %s20, 1
      %s28 = ssub.s32 %s20, %s27
      %p29 = scmp.eq.s32.totalorder %s28, 0
      %s31 = sadd.s32 %s30, 1
      %s32 = scalar_select %p29, %s30, %s31
      %p35 = pneg %p29
      %p36 = scmp.eq.s32.totalorder %s20, 1
      %p37 = por %p35, %p36
      %p38 = scmp.ne.s32.totalorder %s30, %s33
      %p39 = scmp.eq.s32.totalorder %s20, 0
      %p40 = por %p38, %p39
      %p41 = scmp.ne.s32.totalorder %s30, %s33
      %p42 = scmp.eq.s32.totalorder %s25, 1
      %p43 = por %p41, %p42
      %p44 = scmp.ne.s32.totalorder %s33, %s34
      %p45 = scmp.eq.s32.totalorder %s25, 0
      %p46 = por %p44, %p45
      %p47 = scmp.ne.s32.totalorder %s33, %s34
      %p48 = scmp.eq.s32.totalorder %s26, 1
      %p49 = por %p47, %p48
      %p51 = scmp.ne.s32.totalorder %s34, %s50
      %p52 = scmp.eq.s32.totalorder %s26, 0
      %p53 = por %p51, %p52
      %s54 = ssub.s32 %s20, %s27
      %p55 = scmp.eq.s32.totalorder %s54, 0
      %s57 = sadd.s32 %s56, 1
      %s58 = scalar_select %p55, %s56, %s57
      %p61 = pneg %p55
      %p62 = scmp.eq.s32.totalorder %s20, 1
      %p63 = por %p61, %p62
      %p64 = scmp.ne.s32.totalorder %s56, %s59
      %p65 = scmp.eq.s32.totalorder %s20, 0
      %p66 = por %p64, %p65
      %p67 = scmp.ne.s32.totalorder %s56, %s59
      %p68 = scmp.eq.s32.totalorder %s25, 1
      %p69 = por %p67, %p68
      %p70 = scmp.ne.s32.totalorder %s59, %s60
      %p71 = scmp.eq.s32.totalorder %s25, 0
      %p72 = por %p70, %p71
      %p73 = scmp.ne.s32.totalorder %s59, %s60
      %p74 = scmp.eq.s32.totalorder %s26, 1
      %p75 = por %p73, %p74
      %p77 = scmp.ne.s32.totalorder %s60, %s76
      %p78 = scmp.eq.s32.totalorder %s26, 0
      %p79 = por %p77, %p78
      %s80 = ssub.s32 %s20, %s27
      %p81 = scmp.eq.s32.totalorder %s80, 0
      %s83 = sadd.s32 %s82, 1
      %s84 = scalar_select %p81, %s82, %s83
      %p87 = pneg %p81
      %p88 = scmp.eq.s32.totalorder %s20, 1
      %p89 = por %p87, %p88
      %p90 = scmp.ne.s32.totalorder %s82, %s85
      %p91 = scmp.eq.s32.totalorder %s20, 0
      %p92 = por %p90, %p91
      %p93 = scmp.ne.s32.totalorder %s82, %s85
      %p94 = scmp.eq.s32.totalorder %s25, 1
      %p95 = por %p93, %p94
      %p96 = scmp.ne.s32.totalorder %s85, %s86
      %p97 = scmp.eq.s32.totalorder %s25, 0
      %p98 = por %p96, %p97
      %p99 = scmp.ne.s32.totalorder %s85, %s86
      %p100 = scmp.eq.s32.totalorder %s26, 1
      %p101 = por %p99, %p100
      %p103 = scmp.ne.s32.totalorder %s86, %s102
      %p104 = scmp.eq.s32.totalorder %s26, 0
      %p105 = por %p103, %p104
      %s107 = sadd.s32 %s106, 1
      %p110 = scmp.eq.s32.totalorder %s20, 1
      %p111 = scmp.ne.s32.totalorder %s106, %s108
      %p112 = scmp.eq.s32.totalorder %s20, 0
      %p113 = por %p111, %p112
      %p114 = scmp.ne.s32.totalorder %s106, %s108
      %p115 = scmp.eq.s32.totalorder %s25, 1
      %p116 = por %p114, %p115
      %p117 = scmp.ne.s32.totalorder %s108, %s109
      %p118 = scmp.eq.s32.totalorder %s25, 0
      %p119 = por %p117, %p118
      %p120 = scmp.ne.s32.totalorder %s108, %s109
      %p121 = scmp.eq.s32.totalorder %s26, 1
      %p122 = por %p120, %p121
      %p124 = scmp.ne.s32.totalorder %s109, %s123
      %p125 = scmp.eq.s32.totalorder %s26, 0
      %p126 = por %p124, %p125
      %s128 = sadd.s32 %s127, 1
      %p131 = scmp.eq.s32.totalorder %s20, 1
      %p132 = scmp.ne.s32.totalorder %s127, %s129
      %p133 = scmp.eq.s32.totalorder %s20, 0
      %p134 = por %p132, %p133
      %p135 = scmp.ne.s32.totalorder %s127, %s129
      %p136 = scmp.eq.s32.totalorder %s25, 1
      %p137 = por %p135, %p136
      %p138 = scmp.ne.s32.totalorder %s129, %s130
      %p139 = scmp.eq.s32.totalorder %s25, 0
      %p140 = por %p138, %p139
      %p141 = scmp.ne.s32.totalorder %s129, %s130
      %p142 = scmp.eq.s32.totalorder %s26, 1
      %p143 = por %p141, %p142
      %p145 = scmp.ne.s32.totalorder %s130, %s144
      %p146 = scmp.eq.s32.totalorder %s26, 0
      %p147 = por %p145, %p146
      %s149 = sadd.s32 %s148, 1
      %p152 = scmp.eq.s32.totalorder %s20, 1
      %p153 = scmp.ne.s32.totalorder %s148, %s150
      %p154 = scmp.eq.s32.totalorder %s20, 0
      %p155 = por %p153, %p154
      %p156 = scmp.ne.s32.totalorder %s148, %s150
      %p157 = scmp.eq.s32.totalorder %s25, 1
      %p158 = por %p156, %p157
      %p159 = scmp.ne.s32.totalorder %s150, %s151
      %p160 = scmp.eq.s32.totalorder %s25, 0
      %p161 = por %p159, %p160
      %p162 = scmp.ne.s32.totalorder %s150, %s151
      %p163 = scmp.eq.s32.totalorder %s26, 1
      %p164 = por %p162, %p163
      %p166 = scmp.ne.s32.totalorder %s151, %s165
      %p167 = scmp.eq.s32.totalorder %s26, 0
      %p168 = por %p166, %p167
      %s170 = sadd.s32 %s169, 1
      %p173 = scmp.eq.s32.totalorder %s20, 1
      %p174 = scmp.ne.s32.totalorder %s169, %s171
      %p175 = scmp.eq.s32.totalorder %s20, 0
      %p176 = por %p174, %p175
      %p177 = scmp.ne.s32.totalorder %s169, %s171
      %p178 = scmp.eq.s32.totalorder %s25, 1
      %p179 = por %p177, %p178
      %p180 = scmp.ne.s32.totalorder %s171, %s172
      %p181 = scmp.eq.s32.totalorder %s25, 0
      %p182 = por %p180, %p181
      %p183 = scmp.ne.s32.totalorder %s171, %s172
      %p184 = scmp.eq.s32.totalorder %s26, 1
      %p185 = por %p183, %p184
      %p187 = scmp.ne.s32.totalorder %s172, %s186
      %p188 = scmp.eq.s32.totalorder %s26, 0
      %p189 = por %p187, %p188
      %s190 = ssub.s32 %s20, %s27
      %p191 = scmp.eq.s32.totalorder %s190, 0
      %s193 = sadd.s32 %s192, 1
      %s194 = scalar_select %p191, %s192, %s193
      %p197 = pneg %p191
      %p198 = scmp.eq.s32.totalorder %s20, 1
      %p199 = por %p197, %p198
      %p200 = scmp.ne.s32.totalorder %s192, %s195
      %p201 = scmp.eq.s32.totalorder %s20, 0
      %p202 = por %p200, %p201
      %p203 = scmp.ne.s32.totalorder %s192, %s195
      %p204 = scmp.eq.s32.totalorder %s25, 1
      %p205 = por %p203, %p204
      %p206 = scmp.ne.s32.totalorder %s195, %s196
      %p207 = scmp.eq.s32.totalorder %s25, 0
      %p208 = por %p206, %p207
      %p209 = scmp.ne.s32.totalorder %s195, %s196
      %p210 = scmp.eq.s32.totalorder %s26, 1
      %p211 = por %p209, %p210
      %p213 = scmp.ne.s32.totalorder %s196, %s212
      %p214 = scmp.eq.s32.totalorder %s26, 0
      %p215 = por %p213, %p214
      %p216 = scmp.le.s32.totalorder 1, %s20
      %p217 = scmp.lt.s32.totalorder %s20, 3
      %p218 = pnand %p216, %p217
      %p219 = pneg %p218
      // Predicated region
      $region9: #{tpu_custom_call.1} parent=5 // pred_check
        _
      $region10: #{tpu_custom_call.1} parent=5 // pred_check_branch
        %221 = sbr.rel (%p218) target = $region12
      $region11: #{tpu_custom_call.1} parent=5 // pred_region
        %s222 = ssub.s32 %s20, 1
        // Predicated region
        $region13: #{tpu_custom_call.1} parent=11 // pred_check
          %p223 = pneg %p119
        $region14: #{tpu_custom_call.1} parent=11 // pred_check_branch
          %225 = sbr.rel (%p223) target = $region16
        $region15: #{tpu_custom_call.1} parent=11 // pred_region
          %s227 = ssub.s32 1024, 1024
          %228 = vsyncadd [#allocation6], %s227
          %s229 = sshll.u32 [#allocation5], 4
          %s230 = int_to_ptr.vmem [resolvable:$true] %s229
          %235 = dma.hbm_to_vmem [thread:$0]  %s3, 1024, %s230, [#allocation6], 64, 64, 4
        $region16: #{tpu_custom_call.1} parent=11 // pred_fallthru
          _
        // Predicated region
        $region17: #{tpu_custom_call.1} parent=11 // pred_check
          %p236 = pneg %p140
        $region18: #{tpu_custom_call.1} parent=11 // pred_check_branch
          %238 = sbr.rel (%p236) target = $region20
        $region19: #{tpu_custom_call.1} parent=11 // pred_region
          %s240 = ssub.s32 1024, 1024
          %241 = vsyncadd [#allocation6], %s240
          %s242 = sshll.u32 [#allocation7], 4
          %s243 = int_to_ptr.vmem [resolvable:$true] %s242
          %248 = dma.hbm_to_vmem [thread:$0]  %s4, 1024, %s243, [#allocation6], 64, 64, 4
        $region20: #{tpu_custom_call.1} parent=11 // pred_fallthru
          _
        // Predicated region
        $region21: #{tpu_custom_call.1} parent=11 // pred_check
          %p249 = pneg %p161
        $region22: #{tpu_custom_call.1} parent=11 // pred_check_branch
          %251 = sbr.rel (%p249) target = $region24
        $region23: #{tpu_custom_call.1} parent=11 // pred_region
          _
        $region24: #{tpu_custom_call.1} parent=11 // pred_fallthru
          _
        // Predicated region
        $region25: #{tpu_custom_call.1} parent=11 // pred_check
          %p252 = pneg %p182
        $region26: #{tpu_custom_call.1} parent=11 // pred_check_branch
          %254 = sbr.rel (%p252) target = $region28
        $region27: #{tpu_custom_call.1} parent=11 // pred_region
          _
        $region28: #{tpu_custom_call.1} parent=11 // pred_fallthru
          _
      $region12: #{tpu_custom_call.1} parent=5 // pred_fallthru
        _
      %p255 = scmp.lt.s32.totalorder %s20, 2
      // Predicated region
      $region29: #{tpu_custom_call.1} parent=5 // pred_check
        %p256 = pneg %p255
      $region30: #{tpu_custom_call.1} parent=5 // pred_check_branch
        %258 = sbr.rel (%p256) target = $region32
      $region31: #{tpu_custom_call.1} parent=5 // pred_region
        // Predicated region
        $region33: #{tpu_custom_call.1} parent=31 // pred_check
          %p259 = pneg %p40
        $region34: #{tpu_custom_call.1} parent=31 // pred_check_branch
          %261 = sbr.rel (%p259) target = $region36
        $region35: #{tpu_custom_call.1} parent=31 // pred_region
          %s262 = sand.u32 %s30, 1
          %s263 = scalar_lea.sflag [#allocation3], %s262
          %s264 = sand.u32 %s30, 1
          %s265 = smul.addr %s264, 16
          %s266 = scalar_lea.vmem [#allocation2], %s265
          %s267 = smul.u32 2, %s20
          %s269 = ssub.s32 256, 256
          %270 = vsyncadd %s263, %s269
          %s271 = smul.addr %s267, 128
          %s272 = scalar_lea.hbm %s0, %s271
          %s273 = sshll.u32 %s266, 4
          %s274 = int_to_ptr.vmem [resolvable:$true] %s273
          %279 = dma.hbm_to_vmem [thread:$0]  %s272, 256, %s274, %s263, 128, 128, 8
        $region36: #{tpu_custom_call.1} parent=31 // pred_fallthru
          _
        // Predicated region
        $region37: #{tpu_custom_call.1} parent=31 // pred_check
          %p280 = pneg %p66
        $region38: #{tpu_custom_call.1} parent=31 // pred_check_branch
          %282 = sbr.rel (%p280) target = $region40
        $region39: #{tpu_custom_call.1} parent=31 // pred_region
          %s283 = smul.u32 2, %s20
          %p284 = scmp.lt.s32.totalorder %s283, 3
          %s285 = scalar_select %p284, %s283, 3
          %s286 = scalar_lea.vmem %s1, %s285
          %s287 = smul.u32 2, %s20
        $region40: #{tpu_custom_call.1} parent=31 // pred_fallthru
          _
        // Predicated region
        $region41: #{tpu_custom_call.1} parent=31 // pred_check
          %p288 = pneg %p92
        $region42: #{tpu_custom_call.1} parent=31 // pred_check_branch
          %290 = sbr.rel (%p288) target = $region44
        $region43: #{tpu_custom_call.1} parent=31 // pred_region
          %s291 = smul.u32 2, %s20
          %p292 = scmp.lt.s32.totalorder %s291, 3
          %s293 = scalar_select %p292, %s291, 3
          %s294 = scalar_lea.vmem %s2, %s293
          %s295 = smul.u32 2, %s20
        $region44: #{tpu_custom_call.1} parent=31 // pred_fallthru
          _
      $region32: #{tpu_custom_call.1} parent=5 // pred_fallthru
        _
      %p296 = scmp.le.s32.totalorder 1, %s20
      %p297 = scmp.lt.s32.totalorder %s20, 3
      %p298 = pnand %p296, %p297
      %p299 = pneg %p298
      // Predicated region
      $region45: #{tpu_custom_call.1} parent=5 // pred_check
        _
      $region46: #{tpu_custom_call.1} parent=5 // pred_check_branch
        %301 = sbr.rel (%p298) target = $region48
      $region47: #{tpu_custom_call.1} parent=5 // pred_region
        %s302 = ssub.s32 %s20, 1
        %s303 = sand.u32 %s33, 1
        %s304 = scalar_lea.sflag [#allocation3], %s303
        %s305 = sand.u32 %s33, 1
        %s306 = smul.addr %s305, 16
        %s307 = scalar_lea.vmem [#allocation2], %s306
        // Predicated region
        $region49: #{tpu_custom_call.1} parent=47 // pred_check
          %p308 = pneg %p46
        $region50: #{tpu_custom_call.1} parent=47 // pred_check_branch
          %310 = sbr.rel (%p308) target = $region52
        $region51: #{tpu_custom_call.1} parent=47 // pred_region
          %311 = dma.done %s304, 256
        $region52: #{tpu_custom_call.1} parent=47 // pred_fallthru
          _
        // Predicated region
        $region53: #{tpu_custom_call.1} parent=47 // pred_check
          %p312 = pneg %p119
        $region54: #{tpu_custom_call.1} parent=47 // pred_check_branch
          %314 = sbr.rel (%p312) target = $region56
        $region55: #{tpu_custom_call.1} parent=47 // pred_region
          %315 = dma.done [#allocation6], 1024
        $region56: #{tpu_custom_call.1} parent=47 // pred_fallthru
          _
        // Predicated region
        $region57: #{tpu_custom_call.1} parent=47 // pred_check
          %p316 = pneg %p140
        $region58: #{tpu_custom_call.1} parent=47 // pred_check_branch
          %318 = sbr.rel (%p316) target = $region60
        $region59: #{tpu_custom_call.1} parent=47 // pred_region
          %319 = dma.done [#allocation6], 1024
        $region60: #{tpu_custom_call.1} parent=47 // pred_fallthru
          _
        %s320 = sand.u32 %s33, 1
        %s321 = scalar_lea.sflag [#allocation3], %s320
        %s322 = sand.u32 %s33, 1
        %s323 = smul.addr %s322, 16
        %s324 = scalar_lea.vmem [#allocation2], %s323
        %p325 = pneg %p46
        %p326 = pneg %p43
        %s327 = smul.u32 2, %s25
        %p328 = scmp.lt.s32.totalorder %s327, 3
        %s329 = scalar_select %p328, %s327, 3
        %s330 = scalar_lea.vmem %s1, %s329
        %p331 = pneg %p72
        %p332 = pneg %p69
        %s333 = smul.u32 2, %s25
        %p334 = scmp.lt.s32.totalorder %s333, 3
        %s335 = scalar_select %p334, %s333, 3
        %s336 = scalar_lea.vmem %s2, %s335
        %p337 = pneg %p98
        %p338 = pneg %p95
        %p339 = pneg %p119
        %p340 = pneg %p116
        %p341 = pneg %p140
        %p342 = pneg %p137
        %p343 = pneg %p161
        %p344 = pneg %p158
        %p345 = pneg %p182
        %p346 = pneg %p179
        %p347 = pneg %p208
        %p348 = pneg %p205
        %s349 = sand.u32 %s195, 1
        %s350 = scalar_lea.sflag [#allocation4], %s349
        %s351 = sand.u32 %s195, 1
        %s352 = smul.addr %s351, 2
        %s353 = scalar_lea.vmem [#allocation8], %s352
        %s354 = smul.u32 2, %s25
        %s355 = smul.u32 2, %s25
        %p356 = scmp.lt.s32.totalorder %s355, 3
        %s357 = scalar_select %p356, %s355, 3
        %s358 = scalar_lea.vmem %s1, %s357
        %s359 = smul.u32 2, %s25
        %s360 = smul.u32 2, %s25
        %p361 = scmp.lt.s32.totalorder %s360, 3
        %s362 = scalar_select %p361, %s360, 3
        %s363 = scalar_lea.vmem %s2, %s362
        %s364 = smul.u32 2, %s25
        %s365 = smul.u32 2, %s25
        %v367 = vld [vmem:[%s307] sm:$0xff]
        %v368 = vld [vmem:[%s307 + $0x8] sm:$0xff]
        %v369 = vpack.c.bf16 %v368, %v367
        %v370 = vld [vmem:[#allocation7] sm:$0xf]
        %v371 = vld [vmem:[#allocation7 + $0x4] sm:$0xf]
        %v372 = vld [vmem:[#allocation7 + $0x8] sm:$0xf]
        %v373 = vld [vmem:[#allocation7 + $0xc] sm:$0xf]
        %v374 = vld [vmem:[#allocation7 + $0x10] sm:$0xf]
        %v375 = vld [vmem:[#allocation7 + $0x14] sm:$0xf]
        %v376 = vld [vmem:[#allocation7 + $0x18] sm:$0xf]
        %v377 = vld [vmem:[#allocation7 + $0x1c] sm:$0xf]
        %v378 = vld [vmem:[#allocation7 + $0x20] sm:$0xf]
        %v379 = vld [vmem:[#allocation7 + $0x24] sm:$0xf]
        %v380 = vld [vmem:[#allocation7 + $0x28] sm:$0xf]
        %v381 = vld [vmem:[#allocation7 + $0x2c] sm:$0xf]
        %v382 = vld [vmem:[#allocation7 + $0x30] sm:$0xf]
        %v383 = vld [vmem:[#allocation7 + $0x34] sm:$0xf]
        %v384 = vld [vmem:[#allocation7 + $0x38] sm:$0xf]
        %v385 = vld [vmem:[#allocation7 + $0x3c] sm:$0xf]
        %v402 = vunpack.c.l.b16 %v370
        %v403 = vunpack.c.l.b16 %v371
        %v404 = vunpack.c.l.b16 %v372
        %v405 = vunpack.c.l.b16 %v373
        %v406 = vunpack.c.l.b16 %v374
        %v407 = vunpack.c.l.b16 %v375
        %v408 = vunpack.c.l.b16 %v376
        %v409 = vunpack.c.l.b16 %v377
        %v410 = vunpack.c.l.b16 %v378
        %v411 = vunpack.c.l.b16 %v379
        %v412 = vunpack.c.l.b16 %v380
        %v413 = vunpack.c.l.b16 %v381
        %v414 = vunpack.c.l.b16 %v382
        %v415 = vunpack.c.l.b16 %v383
        %v416 = vunpack.c.l.b16 %v384
        %v417 = vunpack.c.l.b16 %v385
        %v418 = vpack.c.b16 %v403, %v402
        %v419 = vpack.c.b16 %v405, %v404
        %v420 = vpack.c.b16 %v407, %v406
        %v421 = vpack.c.b16 %v409, %v408
        %v422 = vpack.c.b16 %v411, %v410
        %v423 = vpack.c.b16 %v413, %v412
        %v424 = vpack.c.b16 %v415, %v414
        %v425 = vpack.c.b16 %v417, %v416
        %434 = vmatprep.subr.bf16.mxu0 0
        %435 = vmatpush1.bf16.msra.mxu0 %v425
        %436 = vmatprep.subr.bf16.mxu0 0
        %437 = vmatpush1.bf16.msra.mxu0 %v424
        %438 = vmatprep.subr.bf16.mxu0 0
        %439 = vmatpush1.bf16.msra.mxu0 %v423
        %440 = vmatprep.subr.bf16.mxu0 0
        %441 = vmatpush1.bf16.msra.mxu0 %v422
        %442 = vmatprep.subr.bf16.mxu0 0
        %443 = vmatpush1.bf16.msra.mxu0 %v421
        %444 = vmatprep.subr.bf16.mxu0 0
        %445 = vmatpush1.bf16.msra.mxu0 %v420
        %446 = vmatprep.subr.bf16.mxu0 0
        %447 = vmatpush1.bf16.msra.mxu0 %v419
        %448 = vmatprep.subr.bf16.mxu0 0
        %449 = vmatpush1.bf16.msra.mxu0 %v418
        %450 = vmatprep.subr.bf16.mxu0 0
        %451 = vmatpush2.bf16.msra.mxu0 0
        %452 = vmatprep.subr.bf16.mxu0 0
        %453 = vmatpush2.bf16.msra.mxu0 0
        %454 = vmatprep.subr.bf16.mxu0 0
        %455 = vmatpush2.bf16.msra.mxu0 0
        %456 = vmatprep.subr.bf16.mxu0 0
        %457 = vmatpush2.bf16.msra.mxu0 0
        %458 = vmatprep.subr.bf16.mxu0 0
        %459 = vmatpush2.bf16.msra.mxu0 0
        %460 = vmatprep.subr.bf16.mxu0 0
        %461 = vmatpush2.bf16.msra.mxu0 0
        %462 = vmatprep.subr.bf16.mxu0 0
        %463 = vmatpush2.bf16.msra.mxu0 0
        %464 = vmatprep.subr.bf16.mxu0 0
        %465 = vmatpush2.bf16.msra.mxu0 0
        %466 = vmatprep.mubr.bf16.mxu0 0
        %467 = vmatmul.mubr.bf16.gmra.mxu0 %v369
        %v468 = vpop.f32.mrf.mxu0
        %v469 = vadd.f32 0.0, %v468
        %v470 = vpop.f32.mrf.mxu0
        %v471 = vpop.f32.mrf.mxu0
        %v472 = vadd.f32 0.0, %v471
        %v473 = vpop.f32.mrf.mxu0
        %474 = vdwg.mxu0
        %v475 = vld [vmem:[%s358] sm:$0x1]
        %v476 = vld [vmem:[%s358 + $0x1] sm:$0x1]
        %v477 = vpack.c.bf16 %v475, %v475
        %v478 = vpack.c.bf16 %v476, %v476
        %v479 = vld [vmem:[#allocation5] sm:$0xf]
        %v480 = vld [vmem:[#allocation5 + $0x4] sm:$0xf]
        %v481 = vld [vmem:[#allocation5 + $0x8] sm:$0xf]
        %v482 = vld [vmem:[#allocation5 + $0xc] sm:$0xf]
        %v483 = vld [vmem:[#allocation5 + $0x10] sm:$0xf]
        %v484 = vld [vmem:[#allocation5 + $0x14] sm:$0xf]
        %v485 = vld [vmem:[#allocation5 + $0x18] sm:$0xf]
        %v486 = vld [vmem:[#allocation5 + $0x1c] sm:$0xf]
        %v487 = vld [vmem:[#allocation5 + $0x20] sm:$0xf]
        %v488 = vld [vmem:[#allocation5 + $0x24] sm:$0xf]
        %v489 = vld [vmem:[#allocation5 + $0x28] sm:$0xf]
        %v490 = vld [vmem:[#allocation5 + $0x2c] sm:$0xf]
        %v491 = vld [vmem:[#allocation5 + $0x30] sm:$0xf]
        %v492 = vld [vmem:[#allocation5 + $0x34] sm:$0xf]
        %v493 = vld [vmem:[#allocation5 + $0x38] sm:$0xf]
        %v494 = vld [vmem:[#allocation5 + $0x3c] sm:$0xf]
        %v495 = vld [vmem:[%s5] sm:$0x1]
        %v497 = vlaneseq
        %v498 = vshrl.u32 %v497, 7
        %v499 = vsub.s32 0, %v498
        %v500 = vrot.slane %v495, %v499
        %v504 = vunpack.c.l.b16 %v477
        %v505 = vunpack.c.l.b16 %v478
        %v506 = vrot.slane %v505, 7
        %vm507 = vcmask 1041409
        %v508 = vsel %vm507, %v506, %v504
        %v509 = vpack.c.b16 %v508, %v508
        %v527 = vunpack.c.l.b16 %v479
        %v528 = vunpack.c.l.b16 %v480
        %v529 = vunpack.c.l.b16 %v481
        %v530 = vunpack.c.l.b16 %v482
        %v531 = vunpack.c.l.b16 %v483
        %v532 = vunpack.c.l.b16 %v484
        %v533 = vunpack.c.l.b16 %v485
        %v534 = vunpack.c.l.b16 %v486
        %v535 = vunpack.c.l.b16 %v487
        %v536 = vunpack.c.l.b16 %v488
        %v537 = vunpack.c.l.b16 %v489
        %v538 = vunpack.c.l.b16 %v490
        %v539 = vunpack.c.l.b16 %v491
        %v540 = vunpack.c.l.b16 %v492
        %v541 = vunpack.c.l.b16 %v493
        %v542 = vunpack.c.l.b16 %v494
        %v543 = vpack.c.b16 %v528, %v527
        %v544 = vpack.c.b16 %v530, %v529
        %v545 = vpack.c.b16 %v532, %v531
        %v546 = vpack.c.b16 %v534, %v533
        %v547 = vpack.c.b16 %v536, %v535
        %v548 = vpack.c.b16 %v538, %v537
        %v549 = vpack.c.b16 %v540, %v539
        %v550 = vpack.c.b16 %v542, %v541
        %559 = vmatprep.subr.bf16.mxu0 0
        %560 = vmatpush1.bf16.msra.mxu0 %v550
        %561 = vmatprep.subr.bf16.mxu0 0
        %562 = vmatpush1.bf16.msra.mxu0 %v549
        %563 = vmatprep.subr.bf16.mxu0 0
        %564 = vmatpush1.bf16.msra.mxu0 %v548
        %565 = vmatprep.subr.bf16.mxu0 0
        %566 = vmatpush1.bf16.msra.mxu0 %v547
        %567 = vmatprep.subr.bf16.mxu0 0
        %568 = vmatpush1.bf16.msra.mxu0 %v546
        %569 = vmatprep.subr.bf16.mxu0 0
        %570 = vmatpush1.bf16.msra.mxu0 %v545
        %571 = vmatprep.subr.bf16.mxu0 0
        %572 = vmatpush1.bf16.msra.mxu0 %v544
        %573 = vmatprep.subr.bf16.mxu0 0
        %574 = vmatpush1.bf16.msra.mxu0 %v543
        %575 = vmatprep.subr.bf16.mxu0 0
        %576 = vmatpush2.bf16.msra.mxu0 0
        %577 = vmatprep.subr.bf16.mxu0 0
        %578 = vmatpush2.bf16.msra.mxu0 0
        %579 = vmatprep.subr.bf16.mxu0 0
        %580 = vmatpush2.bf16.msra.mxu0 0
        %581 = vmatprep.subr.bf16.mxu0 0
        %582 = vmatpush2.bf16.msra.mxu0 0
        %583 = vmatprep.subr.bf16.mxu0 0
        %584 = vmatpush2.bf16.msra.mxu0 0
        %585 = vmatprep.subr.bf16.mxu0 0
        %586 = vmatpush2.bf16.msra.mxu0 0
        %587 = vmatprep.subr.bf16.mxu0 0
        %588 = vmatpush2.bf16.msra.mxu0 0
        %589 = vmatprep.subr.bf16.mxu0 0
        %590 = vmatpush2.bf16.msra.mxu0 0
        %591 = vmatprep.mubr.bf16.mxu0 0
        %592 = vmatmul.mubr.bf16.gmra.mxu0 %v509
        %v593 = vpop.f32.mrf.mxu0
        %v594 = vadd.f32 %v500, %v593
        %v595 = vpop.f32.mrf.mxu0
        %v596 = vpop.f32.mrf.mxu0
        %v597 = vpop.f32.mrf.mxu0
        %598 = vdwg.mxu0
        %v601 = vunpack.c.l.s4 1966171168
        %v602 = vunpack.c.0.s8 %v601
        %v603 = vlaneseq
        %v604 = vshrl.u32 %v603, 7
        %v605 = vsub.s32 %v602, %v604
        %v606 = vrot.slane %v594, %v605
        %v607 = vcombine.high %v606, %v606
        %v609 = vunpack.c.l.s4 1966171168
        %v610 = vunpack.c.0.s8 %v609
        %v611 = vlaneseq
        %v612 = vshrl.u32 %v611, 7
        %v613 = vsub.s32 %v610, %v612
        %v614 = vrot.slane %v606, %v613
        %v616 = vunpack.c.l.s4 1966171168
        %v617 = vunpack.c.0.s8 %v616
        %v618 = vlaneseq
        %v619 = vshrl.u32 %v618, 7
        %v620 = vsub.s32 %v617, %v619
        %v621 = vrot.slane %v607, %v620
        %v622 = vlaneseq
        %v623 = vshrl.u32 %v622, 7
        %v624 = vsub.s32 0, %v623
        %v625 = vrot.slane %v614, %v624
        %v626 = vlaneseq
        %v627 = vshrl.u32 %v626, 7
        %v628 = vsub.s32 0, %v627
        %v629 = vrot.slane %v621, %v628
        %v632 = vadd.f32 %v469, %v625
        %v633 = vadd.f32 %v472, %v629
        %v634 = vtanh.pop %v632
        %v635 = vtanh.pop %v633
        %v636 = vld [vmem:[%s6] sm:$0x1]
        %v638 = vlaneseq
        %v639 = vshrl.u32 %v638, 7
        %v640 = vsub.s32 0, %v639
        %v641 = vrot.slane %v636, %v640
        %v643 = vmul.f32 %v634, %v641
        %v644 = vmul.f32 %v635, %v641
        %645 = vadd.xlane.f32.xlu0 %v643
        %v646 = vpop.xlane.xlu0 %645
        %647 = vadd.xlane.f32.xlu0 %v644
        %v648 = vpop.xlane.xlu0 %647
        %v649 = vlaneseq
        %v650 = vshrl.u32 %v649, 7
        %v651 = vld [vmem:[%s363] sm:$0x1]
        %v652 = vld [vmem:[%s363 + $0x1] sm:$0x1]
        %v653 = vlaneseq
        %v654 = vshrl.u32 %v653, 7
        %v655 = vsub.s32 0, %v654
        %v656 = vrot.slane %v651, %v655
        %v657 = vlaneseq
        %v658 = vshrl.u32 %v657, 7
        %v659 = vsub.s32 0, %v658
        %v660 = vrot.slane %v652, %v659
        %vm661 = vcmp.lt.s32.totalorder %v650, %v656
        %vm662 = vcmp.lt.s32.totalorder %v650, %v660
        %v663 = vsel %vm661, %v646, -inf
        %v664 = vsel %vm662, %v648, -inf
        %vm665 = vcmask 7168
        %v666 = vsel %vm665, %v663, -inf
        %v667 = vrot.slane %v666, 4
        %v668 = vmax.f32 %v666, %v667
        %v669 = vrot.slane %v668, 2
        %v670 = vmax.f32 %v668, %v669
        %v671 = vrot.slane %v670, 1
        %v672 = vmax.f32 %v670, %v671
        %v673 = vsel %vm665, %v664, -inf
        %v674 = vrot.slane %v673, 4
        %v675 = vmax.f32 %v673, %v674
        %v676 = vrot.slane %v675, 2
        %v677 = vmax.f32 %v675, %v676
        %v678 = vrot.slane %v677, 1
        %v679 = vmax.f32 %v677, %v678
        %v680 = vsub.f32 %v663, %v672
        %v681 = vsub.f32 %v664, %v679
        %v682 = vmul.f32 %v680, 1.442695
        %v683 = vpow.pop %v682
        %v684 = vmul.f32 %v681, 1.442695
        %v685 = vpow.pop %v684
        %v686 = vsel %vm665, %v683, 0.0
        %v687 = vrot.slane %v686, 4
        %v688 = vadd.f32 %v686, %v687
        %v689 = vrot.slane %v688, 2
        %v690 = vadd.f32 %v688, %v689
        %v691 = vrot.slane %v690, 1
        %v692 = vadd.f32 %v690, %v691
        %v693 = vsel %vm665, %v685, 0.0
        %v694 = vrot.slane %v693, 4
        %v695 = vadd.f32 %v693, %v694
        %v696 = vrot.slane %v695, 2
        %v697 = vadd.f32 %v695, %v696
        %v698 = vrot.slane %v697, 1
        %v699 = vadd.f32 %v697, %v698
        %v700 = vrcp.pop %v692
        %v701 = vrcp.pop %v699
        %v702 = vmul.f32 %v683, %v700
        %v703 = vmul.f32 %v685, %v701
        %705 = vset.pattern.permute.xlu0 0
        %706 = vperm.xlu0 %705, %v702
        %v707 = vpop.permute.xlu0 %706
        %710 = vset.pattern.permute.xlu0 0
        %711 = vperm.xlu0 %710, %v703
        %v712 = vpop.permute.xlu0 %711
        %v714 = vmul.f32 %v367, %v707
        %v715 = vmul.f32 %v368, %v712
        %v716 = vrot.slane %v714, 4
        %v717 = vadd.f32 %v714, %v716
        %v718 = vrot.slane %v717, 2
        %v719 = vadd.f32 %v717, %v718
        %v720 = vrot.slane %v719, 1
        %v721 = vadd.f32 %v719, %v720
        %v722 = vrot.slane %v715, 4
        %v723 = vadd.f32 %v715, %v722
        %v724 = vrot.slane %v723, 2
        %v725 = vadd.f32 %v723, %v724
        %v726 = vrot.slane %v725, 1
        %v727 = vadd.f32 %v725, %v726
        %728 = vst [vmem:[%s353] sm:$0x1] %v721
        %729 = vst [vmem:[%s353 + $0x1] sm:$0x1] %v727
        %s730 = sand.u32 %s195, 1
        %s731 = scalar_lea.sflag [#allocation4], %s730
        %s732 = sand.u32 %s195, 1
        %s733 = smul.addr %s732, 2
        %s734 = scalar_lea.vmem [#allocation8], %s733
        // Predicated region
        $region61: #{tpu_custom_call.1} parent=47 // pred_check
          %p735 = pneg %p205
        $region62: #{tpu_custom_call.1} parent=47 // pred_check_branch
          %737 = sbr.rel (%p735) target = $region64
        $region63: #{tpu_custom_call.1} parent=47 // pred_region
          %s738 = smul.u32 2, %s25
          %s740 = ssub.s32 32, 32
          %741 = vsyncadd %s731, %s740
          %s742 = smul.addr %s738, 16
          %s743 = scalar_lea.hbm %s7, %s742
          %s744 = sshll.u32 %s734, 4
          %s745 = int_to_ptr.vmem [resolvable:$true] %s744
          %750 = dma.vmem_to_hbm [thread:$0]  %s745, 32, %s743, %s731, 16, 16, 1
        $region64: #{tpu_custom_call.1} parent=47 // pred_fallthru
          _
      $region48: #{tpu_custom_call.1} parent=5 // pred_fallthru
        _
      %p751 = scmp.le.s32.totalorder 2, %s20
      // Predicated region
      $region65: #{tpu_custom_call.1} parent=5 // pred_check
        %p752 = pneg %p751
      $region66: #{tpu_custom_call.1} parent=5 // pred_check_branch
        %754 = sbr.rel (%p752) target = $region68
      $region67: #{tpu_custom_call.1} parent=5 // pred_region
        %s755 = ssub.s32 %s20, 2
        // Predicated region
        $region69: #{tpu_custom_call.1} parent=67 // pred_check
          %p756 = pneg %p211
        $region70: #{tpu_custom_call.1} parent=67 // pred_check_branch
          %758 = sbr.rel (%p756) target = $region72
        $region71: #{tpu_custom_call.1} parent=67 // pred_region
          %s759 = sand.u32 %s196, 1
          %s760 = scalar_lea.sflag [#allocation4], %s759
          %s761 = sand.u32 %s196, 1
          %s762 = smul.addr %s761, 2
          %s763 = scalar_lea.vmem [#allocation8], %s762
          %764 = dma.done %s760, 32
        $region72: #{tpu_custom_call.1} parent=67 // pred_fallthru
          _
      $region68: #{tpu_custom_call.1} parent=5 // pred_fallthru
        _
    $region6: #{tpu_custom_call.1} parent=1 // loop_footer
      %s24 = sadd.s32 1, %s20
    $region7: #{tpu_custom_call.1} parent=1 // loop_footer_branch
      %19 = sbr.rel target = $region3
    $region8: #{tpu_custom_call.1} parent=1 // loop_exit
      _
    %765 = vsyncpa [#allocation3], 1
    %s766 = scalar_lea.sflag [#allocation3], 1
    %767 = vsyncpa %s766, 1
    %768 = vsyncpa [#allocation6], 1
    %769 = vsyncpa [#allocation4], 1
    %s770 = scalar_lea.sflag [#allocation4], 1
    %771 = vsyncpa %s770, 1

</llo_original>
